<compile_context>
chip_gen: v5e
topology: v5e:2x2
jax: 0.10.0
libtpu: 0.0.40
codegen_flags: <defaults>
</compile_context>

<pallas_src>
import jax
import jax.numpy as jnp
from jax import lax
from jax.experimental import pallas as pl
from jax.experimental.pallas import tpu as pltpu

# Small, module-consistent shapes.
B, S, H = 2, 8, 32          # batch, seq, hidden
NH, DH = 2, 16              # heads, head dim (NH * DH == H)
F = 64                      # FFN intermediate
V = 50                      # vocab size
VP = 64                     # vocab padded (sublane-aligned) for one-hot matmul
LANES = 128                 # lane-dense width of the packed slab / pooler output
N = B * S
EPS = 1e-5

# ---- packed-parameter slab layout (rows; all sublane offsets multiples of 8) --
R_EMB = 0                   # (VP, H)     embedding table (zero-padded rows V:VP)
R_QKV = R_EMB + VP          # (H, 3H)     fused Wq|Wk|Wv
R_WO = R_QKV + H            # (H, H)
R_W1 = R_WO + H             # (H, F)
R_W2 = R_W1 + H             # (F, H)
R_WP = R_W2 + F             # (H, LANES)  pooler weight in column 0
R_VEC = R_WP + H            # (9, LANES)  biases / LN params / pooler bias
SLAB_ROWS = 272             # R_VEC + 9 = 265, rounded up to a multiple of 8


def _layer_norm(x, gamma, beta):
    mean = jnp.mean(x, axis=-1, keepdims=True)
    var = jnp.mean((x - mean) ** 2, axis=-1, keepdims=True)
    return (x - mean) * lax.rsqrt(var + EPS) * gamma + beta


# ------------------------------ Pallas kernel ------------------------------ #

def cross_encoder_kernel(ids_ref, slab_ref, out_ref):
    """Full CrossEncoder forward for the whole batch in one invocation."""
    f32 = jnp.float32

    # ---- static, aligned views into the single packed parameter slab --------
    emb = slab_ref[R_EMB:R_EMB + VP, 0:H]              # (64, 32)
    wqkv = slab_ref[R_QKV:R_QKV + H, 0:3 * H]          # (32, 96)
    wo = slab_ref[R_WO:R_WO + H, 0:H]                  # (32, 32)
    w1 = slab_ref[R_W1:R_W1 + H, 0:F]                  # (32, 64)
    w2 = slab_ref[R_W2:R_W2 + F, 0:H]                  # (64, 32)
    wp = slab_ref[R_WP:R_WP + H, :]                    # (32, 128), col 0 = pooler
    vec = slab_ref[R_VEC:R_VEC + 9, :]                 # (9, 128)

    b_qkv = vec[0:1, 0:3 * H]                          # bq|bk|bv
    bo = vec[1:2, 0:H]
    b1 = vec[2:3, 0:F]
    b2 = vec[3:4, 0:H]
    g1 = vec[4:5, 0:H]
    be1 = vec[5:6, 0:H]
    g2 = vec[6:7, 0:H]
    be2 = vec[7:8, 0:H]
    bp = vec[8:9, :]                                   # pooler bias (bcast 128)

    # ---- embedding lookup as a one-hot matmul (no dynamic gather) -----------
    ids = ids_ref[...]                                               # (N, 1) i32
    iota = lax.broadcasted_iota(jnp.int32, (N, VP), 1)
    onehot = (iota == ids).astype(f32)                               # (N, VP)
    h = jnp.dot(onehot, emb, preferred_element_type=f32)             # (N, H)

    # ---- fused QKV projection: one (N,H)@(H,3H) matmul ----------------------
    qkv = jnp.dot(h, wqkv, preferred_element_type=f32) + b_qkv       # (N, 3H)

    # ---- one deliberate relayout into the batched (B*NH, S, DH) layout ------
    # reshape (N,3H)->(B,S,3H) only splits the sublane axis (free); per-head
    # lane slices + leading-axis concat build q3/k3/v3 without a scratch.
    qkv3 = qkv.reshape(B, S, 3 * H)

    def head_stack(base):
        return jnp.concatenate(
            [qkv3[:, :, base + hd * DH: base + (hd + 1) * DH] for hd in range(NH)],
            axis=0)                                                  # (NH*B, S, DH)

    q3 = head_stack(0)
    k3 = head_stack(H)
    v3 = head_stack(2 * H)

    # ---- batched attention over g = hd*B + b ---------------------------------
    scale = 1.0 / (DH ** 0.5)
    s = jnp.einsum('gqd,gkd->gqk', q3, k3, preferred_element_type=f32) * scale
    s = s - jnp.max(s, axis=-1, keepdims=True)
    e = jnp.exp(s)
    p = e * (1.0 / jnp.sum(e, axis=-1, keepdims=True))               # 1 recip/row
    ctx3 = jnp.einsum('gqk,gkd->gqd', p, v3, preferred_element_type=f32)

    # back to token-major layout (N, H): lane-concat heads, merge leading dims.
    ctx = jnp.concatenate([ctx3[hd * B:(hd + 1) * B] for hd in range(NH)], axis=-1)
    ctx = ctx.reshape(N, H)

    # ---- hoisted output projection: single (N,H)@(H,H) matmul ----------------
    attn = jnp.dot(ctx, wo, preferred_element_type=f32) + bo

    h1 = _layer_norm(h + attn, g1, be1)

    # ---- FFN ------------------------------------------------------------------
    ffn = jnp.dot(h1, w1, preferred_element_type=f32) + b1
    ffn = jax.nn.gelu(ffn)                                           # tanh approx
    ffn = jnp.dot(ffn, w2, preferred_element_type=f32) + b2
    h2 = _layer_norm(h1 + ffn, g2, be2)

    # ---- CLS pooler on CLS rows only (lane-dense (B, 128) store) -------------
    cls = jnp.concatenate([h2[b * S: b * S + 1, :] for b in range(B)], axis=0)
    out_ref[...] = jnp.dot(cls, wp, preferred_element_type=f32) + bp


# -------------------------- packing & wrapper ------------------------------- #

def pack_params(p):
    """One-time wrapper-side packing of all parameters into one (272,128) slab."""
    slab = jnp.zeros((SLAB_ROWS, LANES), jnp.float32)
    slab = slab.at[R_EMB:R_EMB + V, 0:H].set(p["embed"])
    w_qkv = jnp.concatenate([p["wq"], p["wk"], p["wv"]], axis=1)      # (H, 3H)
    slab = slab.at[R_QKV:R_QKV + H, 0:3 * H].set(w_qkv)
    slab = slab.at[R_WO:R_WO + H, 0:H].set(p["wo"])
    slab = slab.at[R_W1:R_W1 + H, 0:F].set(p["w1"])
    slab = slab.at[R_W2:R_W2 + F, 0:H].set(p["w2"])
    slab = slab.at[R_WP:R_WP + H, 0:1].set(p["wp"])

    b_qkv = jnp.concatenate([p["bq"], p["bk"], p["bv"]], axis=1).reshape(-1)
    slab = slab.at[R_VEC + 0, 0:3 * H].set(b_qkv)
    slab = slab.at[R_VEC + 1, 0:H].set(p["bo"].reshape(-1))
    slab = slab.at[R_VEC + 2, 0:F].set(p["b1"].reshape(-1))
    slab = slab.at[R_VEC + 3, 0:H].set(p["b2"].reshape(-1))
    slab = slab.at[R_VEC + 4, 0:H].set(p["g1"].reshape(-1))
    slab = slab.at[R_VEC + 5, 0:H].set(p["be1"].reshape(-1))
    slab = slab.at[R_VEC + 6, 0:H].set(p["g2"].reshape(-1))
    slab = slab.at[R_VEC + 7, 0:H].set(p["be2"].reshape(-1))
    slab = slab.at[R_VEC + 8, :].set(jnp.full((LANES,), p["bp"][0, 0], jnp.float32))
    return slab


def cross_encoder_forward(ids, slab):
    ids2d = ids.reshape(N, 1).astype(jnp.int32)
    pool = pl.pallas_call(
        cross_encoder_kernel,
        out_shape=jax.ShapeDtypeStruct((B, LANES), jnp.float32),
    )(ids2d, slab)
    # pooler score is lane 0 of each CLS row.
    return pool[:, 0:1]                                               # (B, 1)


# --------------------------- params & reference ----------------------------- #

def init_params(key):
    ks = jax.random.split(key, 8)
    n = lambda k, shp: jax.random.normal(k, shp, jnp.float32) * 0.02
    return {
        "embed": n(ks[0], (V, H)),
        "wq": n(ks[1], (H, H)), "bq": jnp.zeros((1, H), jnp.float32),
        "wk": n(ks[2], (H, H)), "bk": jnp.zeros((1, H), jnp.float32),
        "wv": n(ks[3], (H, H)), "bv": jnp.zeros((1, H), jnp.float32),
        "wo": n(ks[4], (H, H)), "bo": jnp.zeros((1, H), jnp.float32),
        "g1": jnp.ones((1, H), jnp.float32), "be1": jnp.zeros((1, H), jnp.float32),
        "w1": n(ks[5], (H, F)), "b1": jnp.zeros((1, F), jnp.float32),
        "w2": n(ks[6], (F, H)), "b2": jnp.zeros((1, H), jnp.float32),
        "g2": jnp.ones((1, H), jnp.float32), "be2": jnp.zeros((1, H), jnp.float32),
        "wp": n(ks[7], (H, 1)), "bp": jnp.zeros((1, 1), jnp.float32),
    }


def reference(ids, p):
    """Pure-JAX reference mirroring the kernel math."""
    def one(h):
        q = h @ p["wq"] + p["bq"]
        k = h @ p["wk"] + p["bk"]
        v = h @ p["wv"] + p["bv"]
        outs = []
        for hd in range(NH):
            sl = slice(hd * DH, (hd + 1) * DH)
            s = (q[:, sl] @ k[:, sl].T) * (1.0 / (DH ** 0.5))
            s = s - jnp.max(s, axis=-1, keepdims=True)
            e = jnp.exp(s)
            a = e * (1.0 / jnp.sum(e, axis=-1, keepdims=True))
            outs.append(a @ v[:, sl])
        attn = jnp.concatenate(outs, axis=-1) @ p["wo"] + p["bo"]
        h1 = _layer_norm(h + attn, p["g1"], p["be1"])
        ffn = jax.nn.gelu(h1 @ p["w1"] + p["b1"]) @ p["w2"] + p["b2"]
        return _layer_norm(h1 + ffn, p["g2"], p["be2"])

    h = jnp.take(p["embed"], ids, axis=0).astype(jnp.float32)
    h = jax.vmap(one)(h)
    cls = h[:, 0, :]
    return cls @ p["wp"] + p["bp"]


if __name__ == "__main__":
    key = jax.random.PRNGKey(0)
    pkey, dkey = jax.random.split(key)
    params = init_params(pkey)
    slab = pack_params(params)
    ids = jax.random.randint(dkey, (B, S), 0, V, dtype=jnp.int32)

    out = cross_encoder_forward(ids, slab)
    out = jax.block_until_ready(out)
    assert out.shape == (B, 1), out.shape

    ref = reference(ids, params)
    assert jnp.allclose(out, ref, atol=1e-4, rtol=1e-4), (out, ref)

    print("KERNEL_OK")
</pallas_src>

<mosaic_0001>
module attributes {stable_mosaic.version = 11 : i64} {
  func.func @cross_encoder_kernel(%arg0: memref<16x1xi32, #tpu.memory_space<vmem>>, %arg1: memref<272x128xf32, #tpu.memory_space<vmem>>, %arg2: memref<2x128xf32, #tpu.memory_space<vmem>>) attributes {dimension_semantics = [], scalar_prefetch = 0 : i64, scratch_operands = 0 : i64, tpu.core_type = #tpu.core_type<tc>} {
    %c0 = arith.constant 0 : index
    %c0_0 = arith.constant 0 : index
    %0 = vector.load %arg1[%c0, %c0_0] : memref<272x128xf32, #tpu.memory_space<vmem>>, vector<64x32xf32>
    %c64 = arith.constant 64 : index
    %c0_1 = arith.constant 0 : index
    %1 = vector.load %arg1[%c64, %c0_1] : memref<272x128xf32, #tpu.memory_space<vmem>>, vector<32x96xf32>
    %c96 = arith.constant 96 : index
    %c0_2 = arith.constant 0 : index
    %2 = vector.load %arg1[%c96, %c0_2] : memref<272x128xf32, #tpu.memory_space<vmem>>, vector<32x32xf32>
    %c128 = arith.constant 128 : index
    %c0_3 = arith.constant 0 : index
    %3 = vector.load %arg1[%c128, %c0_3] : memref<272x128xf32, #tpu.memory_space<vmem>>, vector<32x64xf32>
    %c160 = arith.constant 160 : index
    %c0_4 = arith.constant 0 : index
    %4 = vector.load %arg1[%c160, %c0_4] : memref<272x128xf32, #tpu.memory_space<vmem>>, vector<64x32xf32>
    %c224 = arith.constant 224 : index
    %c0_5 = arith.constant 0 : index
    %5 = vector.load %arg1[%c224, %c0_5] : memref<272x128xf32, #tpu.memory_space<vmem>>, vector<32x128xf32>
    %c256 = arith.constant 256 : index
    %c0_6 = arith.constant 0 : index
    %6 = vector.load %arg1[%c256, %c0_6] : memref<272x128xf32, #tpu.memory_space<vmem>>, vector<9x128xf32>
    %7 = vector.extract_strided_slice %6 {offsets = [0, 0], sizes = [1, 96], strides = [1, 1]} : vector<9x128xf32> to vector<1x96xf32>
    %8 = vector.extract_strided_slice %6 {offsets = [1, 0], sizes = [1, 32], strides = [1, 1]} : vector<9x128xf32> to vector<1x32xf32>
    %9 = vector.extract_strided_slice %6 {offsets = [2, 0], sizes = [1, 64], strides = [1, 1]} : vector<9x128xf32> to vector<1x64xf32>
    %10 = vector.extract_strided_slice %6 {offsets = [3, 0], sizes = [1, 32], strides = [1, 1]} : vector<9x128xf32> to vector<1x32xf32>
    %11 = vector.extract_strided_slice %6 {offsets = [4, 0], sizes = [1, 32], strides = [1, 1]} : vector<9x128xf32> to vector<1x32xf32>
    %12 = vector.extract_strided_slice %6 {offsets = [5, 0], sizes = [1, 32], strides = [1, 1]} : vector<9x128xf32> to vector<1x32xf32>
    %13 = vector.extract_strided_slice %6 {offsets = [6, 0], sizes = [1, 32], strides = [1, 1]} : vector<9x128xf32> to vector<1x32xf32>
    %14 = vector.extract_strided_slice %6 {offsets = [7, 0], sizes = [1, 32], strides = [1, 1]} : vector<9x128xf32> to vector<1x32xf32>
    %15 = vector.extract_strided_slice %6 {offsets = [8, 0], sizes = [1, 128], strides = [1, 1]} : vector<9x128xf32> to vector<1x128xf32>
    %c0_7 = arith.constant 0 : index
    %c0_8 = arith.constant 0 : index
    %16 = vector.load %arg0[%c0_7, %c0_8] : memref<16x1xi32, #tpu.memory_space<vmem>>, vector<16x1xi32>
    %17 = tpu.iota {dimensions = array<i32: 1>} : vector<16x64xi32>
    %18 = vector.broadcast %16 : vector<16x1xi32> to vector<16x64xi32>
    %19 = arith.cmpi eq, %17, %18 : vector<16x64xi32>
    %20 = arith.extui %19 : vector<16x64xi1> to vector<16x64xi32>
    %21 = arith.sitofp %20 : vector<16x64xi32> to vector<16x64xf32>
    %cst = arith.constant dense<0.000000e+00> : vector<16x32xf32>
    %22 = tpu.matmul %21, %0, %cst {dimension_numbers = #tpu.dot_dimension_numbers<[1], [0], [0], [1], [0, 0, 1, 1], [], []>} : vector<16x64xf32>, vector<64x32xf32>, vector<16x32xf32> -> vector<16x32xf32>
    %cst_9 = arith.constant dense<0.000000e+00> : vector<16x96xf32>
    %23 = tpu.matmul %22, %1, %cst_9 {dimension_numbers = #tpu.dot_dimension_numbers<[1], [0], [0], [1], [0, 0, 1, 1], [], []>} : vector<16x32xf32>, vector<32x96xf32>, vector<16x96xf32> -> vector<16x96xf32>
    %24 = vector.broadcast %7 : vector<1x96xf32> to vector<16x96xf32>
    %25 = arith.addf %23, %24 : vector<16x96xf32>
    %26 = vector.shape_cast %25 : vector<16x96xf32> to vector<2x8x96xf32>
    %27 = vector.extract_strided_slice %26 {offsets = [0, 0, 0], sizes = [2, 8, 16], strides = [1, 1, 1]} : vector<2x8x96xf32> to vector<2x8x16xf32>
    %28 = vector.extract_strided_slice %26 {offsets = [0, 0, 16], sizes = [2, 8, 16], strides = [1, 1, 1]} : vector<2x8x96xf32> to vector<2x8x16xf32>
    %29 = tpu.concatenate %27, %28 in 0 : vector<2x8x16xf32>, vector<2x8x16xf32> -> vector<4x8x16xf32>
    %30 = vector.extract_strided_slice %26 {offsets = [0, 0, 32], sizes = [2, 8, 16], strides = [1, 1, 1]} : vector<2x8x96xf32> to vector<2x8x16xf32>
    %31 = vector.extract_strided_slice %26 {offsets = [0, 0, 48], sizes = [2, 8, 16], strides = [1, 1, 1]} : vector<2x8x96xf32> to vector<2x8x16xf32>
    %32 = tpu.concatenate %30, %31 in 0 : vector<2x8x16xf32>, vector<2x8x16xf32> -> vector<4x8x16xf32>
    %33 = vector.extract_strided_slice %26 {offsets = [0, 0, 64], sizes = [2, 8, 16], strides = [1, 1, 1]} : vector<2x8x96xf32> to vector<2x8x16xf32>
    %34 = vector.extract_strided_slice %26 {offsets = [0, 0, 80], sizes = [2, 8, 16], strides = [1, 1, 1]} : vector<2x8x96xf32> to vector<2x8x16xf32>
    %35 = tpu.concatenate %33, %34 in 0 : vector<2x8x16xf32>, vector<2x8x16xf32> -> vector<4x8x16xf32>
    "tpu.trace_start"() <{level = 10 : i32, message = "gqd,gkd->gqk"}> : () -> ()
    %cst_10 = arith.constant dense<0.000000e+00> : vector<4x8x8xf32>
    %36 = tpu.matmul %29, %32, %cst_10 {dimension_numbers = #tpu.dot_dimension_numbers<[2], [2], [1], [1], [0, 0, 0, 1, 1, 1], [0], [0]>} : vector<4x8x16xf32>, vector<4x8x16xf32>, vector<4x8x8xf32> -> vector<4x8x8xf32>
    "tpu.trace_stop"() : () -> ()
    %cst_11 = arith.constant 2.500000e-01 : f32
    %37 = vector.broadcast %cst_11 : f32 to vector<4x8x8xf32>
    %38 = arith.mulf %36, %37 : vector<4x8x8xf32>
    %cst_12 = arith.constant dense<0xFF800000> : vector<4x8xf32>
    %39 = vector.multi_reduction <maximumf>, %38, %cst_12 [2] : vector<4x8x8xf32> to vector<4x8xf32>
    %40 = vector.shape_cast %39 : vector<4x8xf32> to vector<4x8x1xf32>
    %41 = vector.broadcast %40 : vector<4x8x1xf32> to vector<4x8x8xf32>
    %42 = arith.subf %38, %41 : vector<4x8x8xf32>
    %43 = math.exp %42 : vector<4x8x8xf32>
    %cst_13 = arith.constant dense<0.000000e+00> : vector<4x8xf32>
    %44 = vector.multi_reduction <add>, %43, %cst_13 [2] : vector<4x8x8xf32> to vector<4x8xf32>
    %45 = vector.shape_cast %44 : vector<4x8xf32> to vector<4x8x1xf32>
    %cst_14 = arith.constant 1.000000e+00 : f32
    %46 = vector.broadcast %cst_14 : f32 to vector<4x8x1xf32>
    %47 = arith.divf %46, %45 : vector<4x8x1xf32>
    %48 = vector.broadcast %47 : vector<4x8x1xf32> to vector<4x8x8xf32>
    %49 = arith.mulf %43, %48 : vector<4x8x8xf32>
    "tpu.trace_start"() <{level = 10 : i32, message = "gqk,gkd->gqd"}> : () -> ()
    %cst_15 = arith.constant dense<0.000000e+00> : vector<4x8x16xf32>
    %50 = tpu.matmul %49, %35, %cst_15 {dimension_numbers = #tpu.dot_dimension_numbers<[2], [1], [1], [2], [0, 0, 0, 1, 1, 2], [0], [0]>} : vector<4x8x8xf32>, vector<4x8x16xf32>, vector<4x8x16xf32> -> vector<4x8x16xf32>
    "tpu.trace_stop"() : () -> ()
    %51 = vector.extract_strided_slice %50 {offsets = [0, 0, 0], sizes = [2, 8, 16], strides = [1, 1, 1]} : vector<4x8x16xf32> to vector<2x8x16xf32>
    %52 = vector.extract_strided_slice %50 {offsets = [2, 0, 0], sizes = [2, 8, 16], strides = [1, 1, 1]} : vector<4x8x16xf32> to vector<2x8x16xf32>
    %53 = tpu.concatenate %51, %52 in 2 : vector<2x8x16xf32>, vector<2x8x16xf32> -> vector<2x8x32xf32>
    %54 = vector.shape_cast %53 : vector<2x8x32xf32> to vector<16x32xf32>
    %cst_16 = arith.constant dense<0.000000e+00> : vector<16x32xf32>
    %55 = tpu.matmul %54, %2, %cst_16 {dimension_numbers = #tpu.dot_dimension_numbers<[1], [0], [0], [1], [0, 0, 1, 1], [], []>} : vector<16x32xf32>, vector<32x32xf32>, vector<16x32xf32> -> vector<16x32xf32>
    %56 = vector.broadcast %8 : vector<1x32xf32> to vector<16x32xf32>
    %57 = arith.addf %55, %56 : vector<16x32xf32>
    %58 = arith.addf %22, %57 : vector<16x32xf32>
    %cst_17 = arith.constant dense<0.000000e+00> : vector<16xf32>
    %59 = vector.multi_reduction <add>, %58, %cst_17 [1] : vector<16x32xf32> to vector<16xf32>
    %60 = vector.shape_cast %59 : vector<16xf32> to vector<16x1xf32>
    %cst_18 = arith.constant 3.200000e+01 : f32
    %61 = vector.broadcast %cst_18 : f32 to vector<16x1xf32>
    %62 = arith.divf %60, %61 : vector<16x1xf32>
    %63 = vector.broadcast %62 : vector<16x1xf32> to vector<16x32xf32>
    %64 = arith.subf %58, %63 : vector<16x32xf32>
    %65 = arith.mulf %64, %64 : vector<16x32xf32>
    %cst_19 = arith.constant dense<0.000000e+00> : vector<16xf32>
    %66 = vector.multi_reduction <add>, %65, %cst_19 [1] : vector<16x32xf32> to vector<16xf32>
    %67 = vector.shape_cast %66 : vector<16xf32> to vector<16x1xf32>
    %cst_20 = arith.constant 3.200000e+01 : f32
    %68 = vector.broadcast %cst_20 : f32 to vector<16x1xf32>
    %69 = arith.divf %67, %68 : vector<16x1xf32>
    %70 = vector.broadcast %62 : vector<16x1xf32> to vector<16x32xf32>
    %71 = arith.subf %58, %70 : vector<16x32xf32>
    %cst_21 = arith.constant 9.99999974E-6 : f32
    %72 = vector.broadcast %cst_21 : f32 to vector<16x1xf32>
    %73 = arith.addf %69, %72 : vector<16x1xf32>
    %74 = math.rsqrt %73 : vector<16x1xf32>
    %75 = vector.broadcast %74 : vector<16x1xf32> to vector<16x32xf32>
    %76 = arith.mulf %71, %75 : vector<16x32xf32>
    %77 = vector.broadcast %11 : vector<1x32xf32> to vector<16x32xf32>
    %78 = arith.mulf %76, %77 : vector<16x32xf32>
    %79 = vector.broadcast %12 : vector<1x32xf32> to vector<16x32xf32>
    %80 = arith.addf %78, %79 : vector<16x32xf32>
    %cst_22 = arith.constant dense<0.000000e+00> : vector<16x64xf32>
    %81 = tpu.matmul %80, %3, %cst_22 {dimension_numbers = #tpu.dot_dimension_numbers<[1], [0], [0], [1], [0, 0, 1, 1], [], []>} : vector<16x32xf32>, vector<32x64xf32>, vector<16x64xf32> -> vector<16x64xf32>
    %82 = vector.broadcast %9 : vector<1x64xf32> to vector<16x64xf32>
    %83 = arith.addf %81, %82 : vector<16x64xf32>
    %84 = arith.mulf %83, %83 : vector<16x64xf32>
    %85 = arith.mulf %83, %84 : vector<16x64xf32>
    %cst_23 = arith.constant 4.471500e-02 : f32
    %86 = vector.broadcast %cst_23 : f32 to vector<16x64xf32>
    %87 = arith.mulf %86, %85 : vector<16x64xf32>
    %88 = arith.addf %83, %87 : vector<16x64xf32>
    %cst_24 = arith.constant 0.797884583 : f32
    %89 = vector.broadcast %cst_24 : f32 to vector<16x64xf32>
    %90 = arith.mulf %89, %88 : vector<16x64xf32>
    %91 = math.tanh %90 : vector<16x64xf32>
    %cst_25 = arith.constant 1.000000e+00 : f32
    %92 = vector.broadcast %cst_25 : f32 to vector<16x64xf32>
    %93 = arith.addf %92, %91 : vector<16x64xf32>
    %cst_26 = arith.constant 5.000000e-01 : f32
    %94 = vector.broadcast %cst_26 : f32 to vector<16x64xf32>
    %95 = arith.mulf %94, %93 : vector<16x64xf32>
    %96 = arith.mulf %83, %95 : vector<16x64xf32>
    %cst_27 = arith.constant dense<0.000000e+00> : vector<16x32xf32>
    %97 = tpu.matmul %96, %4, %cst_27 {dimension_numbers = #tpu.dot_dimension_numbers<[1], [0], [0], [1], [0, 0, 1, 1], [], []>} : vector<16x64xf32>, vector<64x32xf32>, vector<16x32xf32> -> vector<16x32xf32>
    %98 = vector.broadcast %10 : vector<1x32xf32> to vector<16x32xf32>
    %99 = arith.addf %97, %98 : vector<16x32xf32>
    %100 = arith.addf %80, %99 : vector<16x32xf32>
    %cst_28 = arith.constant dense<0.000000e+00> : vector<16xf32>
    %101 = vector.multi_reduction <add>, %100, %cst_28 [1] : vector<16x32xf32> to vector<16xf32>
    %102 = vector.shape_cast %101 : vector<16xf32> to vector<16x1xf32>
    %cst_29 = arith.constant 3.200000e+01 : f32
    %103 = vector.broadcast %cst_29 : f32 to vector<16x1xf32>
    %104 = arith.divf %102, %103 : vector<16x1xf32>
    %105 = vector.broadcast %104 : vector<16x1xf32> to vector<16x32xf32>
    %106 = arith.subf %100, %105 : vector<16x32xf32>
    %107 = arith.mulf %106, %106 : vector<16x32xf32>
    %cst_30 = arith.constant dense<0.000000e+00> : vector<16xf32>
    %108 = vector.multi_reduction <add>, %107, %cst_30 [1] : vector<16x32xf32> to vector<16xf32>
    %109 = vector.shape_cast %108 : vector<16xf32> to vector<16x1xf32>
    %cst_31 = arith.constant 3.200000e+01 : f32
    %110 = vector.broadcast %cst_31 : f32 to vector<16x1xf32>
    %111 = arith.divf %109, %110 : vector<16x1xf32>
    %112 = vector.broadcast %104 : vector<16x1xf32> to vector<16x32xf32>
    %113 = arith.subf %100, %112 : vector<16x32xf32>
    %cst_32 = arith.constant 9.99999974E-6 : f32
    %114 = vector.broadcast %cst_32 : f32 to vector<16x1xf32>
    %115 = arith.addf %111, %114 : vector<16x1xf32>
    %116 = math.rsqrt %115 : vector<16x1xf32>
    %117 = vector.broadcast %116 : vector<16x1xf32> to vector<16x32xf32>
    %118 = arith.mulf %113, %117 : vector<16x32xf32>
    %119 = vector.broadcast %13 : vector<1x32xf32> to vector<16x32xf32>
    %120 = arith.mulf %118, %119 : vector<16x32xf32>
    %121 = vector.broadcast %14 : vector<1x32xf32> to vector<16x32xf32>
    %122 = arith.addf %120, %121 : vector<16x32xf32>
    %123 = vector.extract_strided_slice %122 {offsets = [0, 0], sizes = [1, 32], strides = [1, 1]} : vector<16x32xf32> to vector<1x32xf32>
    %124 = vector.extract_strided_slice %122 {offsets = [8, 0], sizes = [1, 32], strides = [1, 1]} : vector<16x32xf32> to vector<1x32xf32>
    %125 = tpu.concatenate %123, %124 in 0 : vector<1x32xf32>, vector<1x32xf32> -> vector<2x32xf32>
    %cst_33 = arith.constant dense<0.000000e+00> : vector<2x128xf32>
    %126 = tpu.matmul %125, %5, %cst_33 {dimension_numbers = #tpu.dot_dimension_numbers<[1], [0], [0], [1], [0, 0, 1, 1], [], []>} : vector<2x32xf32>, vector<32x128xf32>, vector<2x128xf32> -> vector<2x128xf32>
    %127 = vector.broadcast %15 : vector<1x128xf32> to vector<2x128xf32>
    %128 = arith.addf %126, %127 : vector<2x128xf32>
    %c0_34 = arith.constant 0 : index
    %c0_35 = arith.constant 0 : index
    %129 = vector.load %arg2[%c0_34, %c0_35] : memref<2x128xf32, #tpu.memory_space<vmem>>, vector<2x128xf32>
    tpu.vector_store %arg2[%c0_34, %c0_35], %128 {strides = array<i32>} : memref<2x128xf32, #tpu.memory_space<vmem>>, vector<2x128xf32>,
    return
  }
}

</mosaic_0001>

<llo_original>
// kernel: tpu_custom_call.1
$region0: #{tpu_custom_call.1}
  #allocation0 [shape = 'u32[]', space=smem, size = 0x4, offset = 0x4, fixed_abs, tag = 'smem constant byte address 0x4 - core index']
  #allocation1 [shape = 'u32[72,128]{1,0:T(1,128)}', space=vmem, size = 0x9000, scoped, tag = 'internal scratch']
  %s0 = inlined_call_operand.vmem [shape: s32[16,1], index: 0, kind: input, shape index: {}]
  %s1 = inlined_call_operand.hbm [shape: f32[272,128], index: 1, kind: input, shape index: {}]
  %s2 = inlined_call_operand.hbm [shape: f32[2,128], index: 2, kind: output, shape index: {}]
  %s3 = sld [smem:[#allocation0]]
  $region22: #{tpu_custom_call.1} parent=0
    _
  %s5 = ssub.s32 1, %s3
  %s6 = scalar_select 0, %s5, %s3
  $region1: #{tpu_custom_call.1} parent=0
    #allocation2 [shape = 'u8[139264]{0}', space=vmem, size = 0x22000, scoped, tag = 'input window, operand 1, single buffered']
    #allocation3 [shape = 's32[1]{0}', space=sflag, size = 0x4, scoped, tag = 'scoped memory for tpu_custom_call.1']
    #allocation4 [shape = 's32[1]{0}', space=sflag, size = 0x4, scoped, tag = 'scoped memory for tpu_custom_call.1']
    #allocation5 [shape = 'u8[1024]{0}', space=vmem, size = 0x400, scoped, tag = 'output window, operand 0, single buffered']
    %7 = vsyncpa [#allocation3], 0
    %8 = vsyncpa [#allocation4], 0
    // Predicated region
    $region2: #{tpu_custom_call.1} parent=1 // pred_check
      _
    $region3: #{tpu_custom_call.1} parent=1 // pred_check_branch
      %10 = sbr.rel (0) target = $region5
    $region4: #{tpu_custom_call.1} parent=1 // pred_region
      _
    $region5: #{tpu_custom_call.1} parent=1 // pred_fallthru
      _
    // Predicated region
    $region6: #{tpu_custom_call.1} parent=1 // pred_check
      _
    $region7: #{tpu_custom_call.1} parent=1 // pred_check_branch
      %12 = sbr.rel (0) target = $region9
    $region8: #{tpu_custom_call.1} parent=1 // pred_region
      %14 = vsyncadd [#allocation3], 0
      %s15 = sshll.u32 %s1, 4
      %s16 = int_to_ptr.hbm [resolvable:$true] %s15
      %s17 = sshll.u32 [#allocation2], 4
      %s18 = int_to_ptr.vmem [resolvable:$true] %s17
      %23 = dma.hbm_to_vmem [thread:$0]  %s16, 4352, %s18, [#allocation3], 128, 128, 8
    $region9: #{tpu_custom_call.1} parent=1 // pred_fallthru
      _
    // Predicated region
    $region10: #{tpu_custom_call.1} parent=1 // pred_check
      _
    $region11: #{tpu_custom_call.1} parent=1 // pred_check_branch
      %25 = sbr.rel (0) target = $region13
    $region12: #{tpu_custom_call.1} parent=1 // pred_region
      %27 = dma.done [#allocation3], 4352
    $region13: #{tpu_custom_call.1} parent=1 // pred_fallthru
      _
    %v28 = vld [vmem:[#allocation2] sm:$0xff]
    %v29 = vld [vmem:[#allocation2 + $0x8] sm:$0xff]
    %v30 = vld [vmem:[#allocation2 + $0x10] sm:$0xff]
    %v31 = vld [vmem:[#allocation2 + $0x18] sm:$0xff]
    %v32 = vld [vmem:[#allocation2 + $0x20] sm:$0xff]
    %v33 = vld [vmem:[#allocation2 + $0x28] sm:$0xff]
    %v34 = vld [vmem:[#allocation2 + $0x30] sm:$0xff]
    %v35 = vld [vmem:[#allocation2 + $0x38] sm:$0xff]
    %v36 = vld [vmem:[#allocation2 + $0x40] sm:$0xff]
    %v37 = vld [vmem:[#allocation2 + $0x48] sm:$0xff]
    %v38 = vld [vmem:[#allocation2 + $0x50] sm:$0xff]
    %v39 = vld [vmem:[#allocation2 + $0x58] sm:$0xff]
    %v40 = vld [vmem:[#allocation2 + $0x60] sm:$0xff]
    %v41 = vld [vmem:[#allocation2 + $0x68] sm:$0xff]
    %v42 = vld [vmem:[#allocation2 + $0x70] sm:$0xff]
    %v43 = vld [vmem:[#allocation2 + $0x78] sm:$0xff]
    %v44 = vld [vmem:[#allocation2 + $0x80] sm:$0xff]
    %v45 = vld [vmem:[#allocation2 + $0x88] sm:$0xff]
    %v46 = vld [vmem:[#allocation2 + $0x90] sm:$0xff]
    %v47 = vld [vmem:[#allocation2 + $0x98] sm:$0xff]
    %v48 = vld [vmem:[#allocation2 + $0xa0] sm:$0xff]
    %v49 = vld [vmem:[#allocation2 + $0xa8] sm:$0xff]
    %v50 = vld [vmem:[#allocation2 + $0xb0] sm:$0xff]
    %v51 = vld [vmem:[#allocation2 + $0xb8] sm:$0xff]
    %v52 = vld [vmem:[#allocation2 + $0xc0] sm:$0xff]
    %v53 = vld [vmem:[#allocation2 + $0xc8] sm:$0xff]
    %v54 = vld [vmem:[#allocation2 + $0xd0] sm:$0xff]
    %v55 = vld [vmem:[#allocation2 + $0xd8] sm:$0xff]
    %v56 = vld [vmem:[#allocation2 + $0xe0] sm:$0xff]
    %v57 = vld [vmem:[#allocation2 + $0xe8] sm:$0xff]
    %v58 = vld [vmem:[#allocation2 + $0xf0] sm:$0xff]
    %v59 = vld [vmem:[#allocation2 + $0xf8] sm:$0xff]
    %v60 = vld [vmem:[#allocation2 + $0x100] sm:$0xff]
    %v61 = vld [vmem:[#allocation2 + $0x108] sm:$0x1]
    %v62 = vld [vmem:[%s0] sm:$0xff]
    %v63 = vld [vmem:[%s0 + $0x8] sm:$0xff]
    %v64 = vlaneseq
    %v65 = vand.u32 %v64, 127
    %66 = vset.pattern.permute.xlu0 0
    %67 = vperm.xlu0 %66, %v62
    %v68 = vpop.permute.xlu0 %67
    %69 = vset.pattern.permute.xlu0 0
    %70 = vperm.xlu0 %69, %v63
    %v71 = vpop.permute.xlu0 %70
    %vm72 = vcmp.eq.s32.totalorder %v65, %v68
    %vm73 = vcmp.eq.s32.totalorder %v65, %v71
    %v74 = vsel %vm72, 1, 0
    %v75 = vsel %vm73, 1, 0
    %v76 = vcvt.s32.f32 %v74
    %v77 = vcvt.s32.f32 %v75
    %vm78 = vcmask 523264
    %v80 = vsel %vm78, %v76, 0
    %v83 = vsel %vm78, %v77, 0
    %85 = vmatpush.msra.mxu0 0.0
    %86 = vmatpush.msra.mxu0 0.0
    %87 = vmatpush.msra.mxu0 0.0
    %88 = vmatpush.msra.mxu0 0.0
    %89 = vmatpush.msra.mxu0 0.0
    %90 = vmatpush.msra.mxu0 0.0
    %91 = vmatpush.msra.mxu0 0.0
    %92 = vmatpush.msra.mxu0 0.0
    %93 = vmatpush.msra.mxu0 %v35
    %94 = vmatpush.msra.mxu0 %v34
    %95 = vmatpush.msra.mxu0 %v33
    %96 = vmatpush.msra.mxu0 %v32
    %97 = vmatpush.msra.mxu0 %v31
    %98 = vmatpush.msra.mxu0 %v30
    %99 = vmatpush.msra.mxu0 %v29
    %100 = vmatpush.msra.mxu0 %v28
    %101 = vmatmul.f32.gmra.mxu0 %v80
    %v102 = vpop.f32.mrf.mxu0
    %v103 = vadd.f32 0.0, %v102
    %104 = vmatmul.f32.gmra.mxu0 %v83
    %v105 = vpop.f32.mrf.mxu0
    %v106 = vadd.f32 0.0, %v105
    %107 = vdwg.mxu0
    %v108 = vperm.slane %v60, 0
    %vm109 = vcmask 261120
    %v111 = vsel %vm109, %v103, 0
    %v114 = vsel %vm109, %v106, 0
    %116 = vmatpush.msra.mxu0 0.0
    %117 = vmatpush.msra.mxu0 0.0
    %118 = vmatpush.msra.mxu0 0.0
    %119 = vmatpush.msra.mxu0 0.0
    %120 = vmatpush.msra.mxu0 0.0
    %121 = vmatpush.msra.mxu0 0.0
    %122 = vmatpush.msra.mxu0 0.0
    %123 = vmatpush.msra.mxu0 0.0
    %124 = vmatpush.msra.mxu0 0.0
    %125 = vmatpush.msra.mxu0 0.0
    %126 = vmatpush.msra.mxu0 0.0
    %127 = vmatpush.msra.mxu0 0.0
    %128 = vmatpush.msra.mxu0 %v39
    %129 = vmatpush.msra.mxu0 %v38
    %130 = vmatpush.msra.mxu0 %v37
    %131 = vmatpush.msra.mxu0 %v36
    %132 = vmatmul.f32.gmra.mxu0 %v111
    %v133 = vpop.f32.mrf.mxu0
    %v134 = vadd.f32 %v108, %v133
    %135 = vmatmul.f32.gmra.mxu0 %v114
    %v136 = vpop.f32.mrf.mxu0
    %v137 = vadd.f32 %v108, %v136
    %138 = vdwg.mxu0
    %141 = vrot.lane.b32.xlu0 %v134, 112
    %v142 = vpop.permute.xlu0 %141
    %143 = vrot.lane.b32.xlu0 %v137, 112
    %v144 = vpop.permute.xlu0 %143
    %145 = vrot.lane.b32.xlu0 %v134, 96
    %v146 = vpop.permute.xlu0 %145
    %vm147 = vcmask 130048
    %v148 = vsel %vm147, %v134, 0
    %v150 = vsel %vm147, %v146, 0
    %152 = vmatpush.xpose.msra.mxu0 0.0
    %153 = vmatpush.xpose.msra.mxu0 0.0
    %154 = vmatpush.xpose.msra.mxu0 0.0
    %155 = vmatpush.xpose.msra.mxu0 0.0
    %156 = vmatpush.xpose.msra.mxu0 0.0
    %157 = vmatpush.xpose.msra.mxu0 0.0
    %158 = vmatpush.xpose.msra.mxu0 0.0
    %159 = vmatpush.xpose.msra.mxu0 0.0
    %160 = vmatpush.xpose.msra.mxu0 0.0
    %161 = vmatpush.xpose.msra.mxu0 0.0
    %162 = vmatpush.xpose.msra.mxu0 0.0
    %163 = vmatpush.xpose.msra.mxu0 0.0
    %164 = vmatpush.xpose.msra.mxu0 0.0
    %165 = vmatpush.xpose.msra.mxu0 0.0
    %166 = vmatpush.xpose.msra.mxu0 0.0
    %167 = vmatpush.xpose.msra.mxu0 %v150
    %168 = vmatmul.f32.gmra.mxu0 %v148
    %v169 = vpop.f32.mrf.mxu0
    %v170 = vadd.f32 0.0, %v169
    %171 = vdwg.mxu0
    %172 = vrot.lane.b32.xlu0 %v137, 96
    %v173 = vpop.permute.xlu0 %172
    %v174 = vsel %vm147, %v137, 0
    %v176 = vsel %vm147, %v173, 0
    %178 = vmatpush.xpose.msra.mxu0 0.0
    %179 = vmatpush.xpose.msra.mxu0 0.0
    %180 = vmatpush.xpose.msra.mxu0 0.0
    %181 = vmatpush.xpose.msra.mxu0 0.0
    %182 = vmatpush.xpose.msra.mxu0 0.0
    %183 = vmatpush.xpose.msra.mxu0 0.0
    %184 = vmatpush.xpose.msra.mxu0 0.0
    %185 = vmatpush.xpose.msra.mxu0 0.0
    %186 = vmatpush.xpose.msra.mxu0 0.0
    %187 = vmatpush.xpose.msra.mxu0 0.0
    %188 = vmatpush.xpose.msra.mxu0 0.0
    %189 = vmatpush.xpose.msra.mxu0 0.0
    %190 = vmatpush.xpose.msra.mxu0 0.0
    %191 = vmatpush.xpose.msra.mxu0 0.0
    %192 = vmatpush.xpose.msra.mxu0 0.0
    %193 = vmatpush.xpose.msra.mxu0 %v176
    %194 = vmatmul.f32.gmra.mxu0 %v174
    %v195 = vpop.f32.mrf.mxu0
    %v196 = vadd.f32 0.0, %v195
    %197 = vdwg.mxu0
    %198 = vrot.lane.b32.xlu0 %v142, 96
    %v199 = vpop.permute.xlu0 %198
    %v200 = vsel %vm147, %v142, 0
    %v202 = vsel %vm147, %v199, 0
    %204 = vmatpush.xpose.msra.mxu0 0.0
    %205 = vmatpush.xpose.msra.mxu0 0.0
    %206 = vmatpush.xpose.msra.mxu0 0.0
    %207 = vmatpush.xpose.msra.mxu0 0.0
    %208 = vmatpush.xpose.msra.mxu0 0.0
    %209 = vmatpush.xpose.msra.mxu0 0.0
    %210 = vmatpush.xpose.msra.mxu0 0.0
    %211 = vmatpush.xpose.msra.mxu0 0.0
    %212 = vmatpush.xpose.msra.mxu0 0.0
    %213 = vmatpush.xpose.msra.mxu0 0.0
    %214 = vmatpush.xpose.msra.mxu0 0.0
    %215 = vmatpush.xpose.msra.mxu0 0.0
    %216 = vmatpush.xpose.msra.mxu0 0.0
    %217 = vmatpush.xpose.msra.mxu0 0.0
    %218 = vmatpush.xpose.msra.mxu0 0.0
    %219 = vmatpush.xpose.msra.mxu0 %v202
    %220 = vmatmul.f32.gmra.mxu0 %v200
    %v221 = vpop.f32.mrf.mxu0
    %v222 = vadd.f32 0.0, %v221
    %223 = vdwg.mxu0
    %224 = vrot.lane.b32.xlu0 %v144, 96
    %v225 = vpop.permute.xlu0 %224
    %v226 = vsel %vm147, %v144, 0
    %v228 = vsel %vm147, %v225, 0
    %230 = vmatpush.xpose.msra.mxu0 0.0
    %231 = vmatpush.xpose.msra.mxu0 0.0
    %232 = vmatpush.xpose.msra.mxu0 0.0
    %233 = vmatpush.xpose.msra.mxu0 0.0
    %234 = vmatpush.xpose.msra.mxu0 0.0
    %235 = vmatpush.xpose.msra.mxu0 0.0
    %236 = vmatpush.xpose.msra.mxu0 0.0
    %237 = vmatpush.xpose.msra.mxu0 0.0
    %238 = vmatpush.xpose.msra.mxu0 0.0
    %239 = vmatpush.xpose.msra.mxu0 0.0
    %240 = vmatpush.xpose.msra.mxu0 0.0
    %241 = vmatpush.xpose.msra.mxu0 0.0
    %242 = vmatpush.xpose.msra.mxu0 0.0
    %243 = vmatpush.xpose.msra.mxu0 0.0
    %244 = vmatpush.xpose.msra.mxu0 0.0
    %245 = vmatpush.xpose.msra.mxu0 %v228
    %246 = vmatmul.f32.gmra.mxu0 %v226
    %v247 = vpop.f32.mrf.mxu0
    %v248 = vadd.f32 0.0, %v247
    %249 = vdwg.mxu0
    %v250 = vmul.f32 %v170, 0.25
    %v251 = vmul.f32 %v196, 0.25
    %v252 = vmul.f32 %v222, 0.25
    %v253 = vmul.f32 %v248, 0.25
    %vm254 = vcmask 64512
    %v255 = vsel %vm254, %v250, -inf
    %256 = vmax.xlane.f32.xlu0 %v255
    %v257 = vpop.xlane.xlu0 %256
    %v258 = vsel %vm254, %v251, -inf
    %259 = vmax.xlane.f32.xlu0 %v258
    %v260 = vpop.xlane.xlu0 %259
    %v261 = vsel %vm254, %v252, -inf
    %262 = vmax.xlane.f32.xlu0 %v261
    %v263 = vpop.xlane.xlu0 %262
    %v264 = vsel %vm254, %v253, -inf
    %265 = vmax.xlane.f32.xlu0 %v264
    %v266 = vpop.xlane.xlu0 %265
    %v267 = vsub.f32 %v250, %v257
    %v268 = vsub.f32 %v251, %v260
    %v269 = vsub.f32 %v252, %v263
    %v270 = vsub.f32 %v253, %v266
    %v271 = vmul.f32 %v267, 1.442695
    %v272 = vpow.pop %v271
    %v273 = vmul.f32 %v268, 1.442695
    %v274 = vpow.pop %v273
    %v275 = vmul.f32 %v269, 1.442695
    %v276 = vpow.pop %v275
    %v277 = vmul.f32 %v270, 1.442695
    %v278 = vpow.pop %v277
    %v279 = vsel %vm254, %v272, 0.0
    %280 = vadd.xlane.f32.xlu0 %v279
    %v281 = vpop.xlane.xlu0 %280
    %v282 = vsel %vm254, %v274, 0.0
    %283 = vadd.xlane.f32.xlu0 %v282
    %v284 = vpop.xlane.xlu0 %283
    %v285 = vsel %vm254, %v276, 0.0
    %286 = vadd.xlane.f32.xlu0 %v285
    %v287 = vpop.xlane.xlu0 %286
    %v288 = vsel %vm254, %v278, 0.0
    %289 = vadd.xlane.f32.xlu0 %v288
    %v290 = vpop.xlane.xlu0 %289
    %v291 = vrcp.pop %v281
    %v292 = vmul.f32 %v281, %v291
    %v293 = vsub.f32 1.0, %v292
    %v294 = vmul.f32 %v291, %v293
    %v295 = vadd.f32 %v291, %v294
    %vm296 = vweird.f32 %v281
    %vm297 = vweird.f32 %v291
    %vm298 = vmor %vm296, %vm297
    %v299 = vsel %vm298, %v291, %v295
    %v300 = vand.u32 2147483647, %v281
    %vm301 = vcmp.eq.f32.partialorder %v300, 8.507059e+37
    %v302 = vand.u32 %v281, 2147483648
    %v303 = vor.u32 1.1754944e-38, %v302
    %v304 = vsel %vm301, %v303, %v299
    %v305 = vmul.f32 1.0, %v304
    %v306 = vrcp.pop %v284
    %v307 = vmul.f32 %v284, %v306
    %v308 = vsub.f32 1.0, %v307
    %v309 = vmul.f32 %v306, %v308
    %v310 = vadd.f32 %v306, %v309
    %vm311 = vweird.f32 %v284
    %vm312 = vweird.f32 %v306
    %vm313 = vmor %vm311, %vm312
    %v314 = vsel %vm313, %v306, %v310
    %v315 = vand.u32 2147483647, %v284
    %vm316 = vcmp.eq.f32.partialorder %v315, 8.507059e+37
    %v317 = vand.u32 %v284, 2147483648
    %v318 = vor.u32 1.1754944e-38, %v317
    %v319 = vsel %vm316, %v318, %v314
    %v320 = vmul.f32 1.0, %v319
    %v321 = vrcp.pop %v287
    %v322 = vmul.f32 %v287, %v321
    %v323 = vsub.f32 1.0, %v322
    %v324 = vmul.f32 %v321, %v323
    %v325 = vadd.f32 %v321, %v324
    %vm326 = vweird.f32 %v287
    %vm327 = vweird.f32 %v321
    %vm328 = vmor %vm326, %vm327
    %v329 = vsel %vm328, %v321, %v325
    %v330 = vand.u32 2147483647, %v287
    %vm331 = vcmp.eq.f32.partialorder %v330, 8.507059e+37
    %v332 = vand.u32 %v287, 2147483648
    %v333 = vor.u32 1.1754944e-38, %v332
    %v334 = vsel %vm331, %v333, %v329
    %v335 = vmul.f32 1.0, %v334
    %v336 = vrcp.pop %v290
    %v337 = vmul.f32 %v290, %v336
    %v338 = vsub.f32 1.0, %v337
    %v339 = vmul.f32 %v336, %v338
    %v340 = vadd.f32 %v336, %v339
    %vm341 = vweird.f32 %v290
    %vm342 = vweird.f32 %v336
    %vm343 = vmor %vm341, %vm342
    %v344 = vsel %vm343, %v336, %v340
    %v345 = vand.u32 2147483647, %v290
    %vm346 = vcmp.eq.f32.partialorder %v345, 8.507059e+37
    %v347 = vand.u32 %v290, 2147483648
    %v348 = vor.u32 1.1754944e-38, %v347
    %v349 = vsel %vm346, %v348, %v344
    %v350 = vmul.f32 1.0, %v349
    %v351 = vmul.f32 %v272, %v305
    %v352 = vmul.f32 %v274, %v320
    %v353 = vmul.f32 %v276, %v335
    %v354 = vmul.f32 %v278, %v350
    %355 = vrot.lane.b32.xlu0 %v134, 64
    %v356 = vpop.permute.xlu0 %355
    %v359 = vsel %vm254, %v351, 0
    %361 = vmatpush.msra.mxu0 0.0
    %362 = vmatpush.msra.mxu0 0.0
    %363 = vmatpush.msra.mxu0 0.0
    %364 = vmatpush.msra.mxu0 0.0
    %365 = vmatpush.msra.mxu0 0.0
    %366 = vmatpush.msra.mxu0 0.0
    %367 = vmatpush.msra.mxu0 0.0
    %368 = vmatpush.msra.mxu0 0.0
    %369 = vmatpush.msra.mxu0 0.0
    %370 = vmatpush.msra.mxu0 0.0
    %371 = vmatpush.msra.mxu0 0.0
    %372 = vmatpush.msra.mxu0 0.0
    %373 = vmatpush.msra.mxu0 0.0
    %374 = vmatpush.msra.mxu0 0.0
    %375 = vmatpush.msra.mxu0 0.0
    %376 = vmatpush.msra.mxu0 %v356
    %377 = vmatmul.f32.gmra.mxu0 %v359
    %v378 = vpop.f32.mrf.mxu0
    %v379 = vadd.f32 0.0, %v378
    %380 = vdwg.mxu0
    %381 = vrot.lane.b32.xlu0 %v137, 64
    %v382 = vpop.permute.xlu0 %381
    %v385 = vsel %vm254, %v352, 0
    %387 = vmatpush.msra.mxu0 0.0
    %388 = vmatpush.msra.mxu0 0.0
    %389 = vmatpush.msra.mxu0 0.0
    %390 = vmatpush.msra.mxu0 0.0
    %391 = vmatpush.msra.mxu0 0.0
    %392 = vmatpush.msra.mxu0 0.0
    %393 = vmatpush.msra.mxu0 0.0
    %394 = vmatpush.msra.mxu0 0.0
    %395 = vmatpush.msra.mxu0 0.0
    %396 = vmatpush.msra.mxu0 0.0
    %397 = vmatpush.msra.mxu0 0.0
    %398 = vmatpush.msra.mxu0 0.0
    %399 = vmatpush.msra.mxu0 0.0
    %400 = vmatpush.msra.mxu0 0.0
    %401 = vmatpush.msra.mxu0 0.0
    %402 = vmatpush.msra.mxu0 %v382
    %403 = vmatmul.f32.gmra.mxu0 %v385
    %v404 = vpop.f32.mrf.mxu0
    %v405 = vadd.f32 0.0, %v404
    %406 = vdwg.mxu0
    %407 = vrot.lane.b32.xlu0 %v142, 64
    %v408 = vpop.permute.xlu0 %407
    %v411 = vsel %vm254, %v353, 0
    %413 = vmatpush.msra.mxu0 0.0
    %414 = vmatpush.msra.mxu0 0.0
    %415 = vmatpush.msra.mxu0 0.0
    %416 = vmatpush.msra.mxu0 0.0
    %417 = vmatpush.msra.mxu0 0.0
    %418 = vmatpush.msra.mxu0 0.0
    %419 = vmatpush.msra.mxu0 0.0
    %420 = vmatpush.msra.mxu0 0.0
    %421 = vmatpush.msra.mxu0 0.0
    %422 = vmatpush.msra.mxu0 0.0
    %423 = vmatpush.msra.mxu0 0.0
    %424 = vmatpush.msra.mxu0 0.0
    %425 = vmatpush.msra.mxu0 0.0
    %426 = vmatpush.msra.mxu0 0.0
    %427 = vmatpush.msra.mxu0 0.0
    %428 = vmatpush.msra.mxu0 %v408
    %429 = vmatmul.f32.gmra.mxu0 %v411
    %v430 = vpop.f32.mrf.mxu0
    %v431 = vadd.f32 0.0, %v430
    %432 = vdwg.mxu0
    %433 = vrot.lane.b32.xlu0 %v144, 64
    %v434 = vpop.permute.xlu0 %433
    %v437 = vsel %vm254, %v354, 0
    %439 = vmatpush.msra.mxu0 0.0
    %440 = vmatpush.msra.mxu0 0.0
    %441 = vmatpush.msra.mxu0 0.0
    %442 = vmatpush.msra.mxu0 0.0
    %443 = vmatpush.msra.mxu0 0.0
    %444 = vmatpush.msra.mxu0 0.0
    %445 = vmatpush.msra.mxu0 0.0
    %446 = vmatpush.msra.mxu0 0.0
    %447 = vmatpush.msra.mxu0 0.0
    %448 = vmatpush.msra.mxu0 0.0
    %449 = vmatpush.msra.mxu0 0.0
    %450 = vmatpush.msra.mxu0 0.0
    %451 = vmatpush.msra.mxu0 0.0
    %452 = vmatpush.msra.mxu0 0.0
    %453 = vmatpush.msra.mxu0 0.0
    %454 = vmatpush.msra.mxu0 %v434
    %455 = vmatmul.f32.gmra.mxu0 %v437
    %v456 = vpop.f32.mrf.mxu0
    %v457 = vadd.f32 0.0, %v456
    %458 = vdwg.mxu0
    %461 = vrot.lane.b32.xlu0 %v431, 16
    %v462 = vpop.permute.xlu0 %461
    %463 = vrot.lane.b32.xlu0 %v457, 16
    %v464 = vpop.permute.xlu0 %463
    %v467 = vsel %vm147, %v379, %v462
    %v468 = vsel %vm147, %v405, %v464
    %v469 = vperm.slane %v60, 1
    %v471 = vsel %vm109, %v467, 0
    %v474 = vsel %vm109, %v468, 0
    %476 = vmatpush.msra.mxu0 0.0
    %477 = vmatpush.msra.mxu0 0.0
    %478 = vmatpush.msra.mxu0 0.0
    %479 = vmatpush.msra.mxu0 0.0
    %480 = vmatpush.msra.mxu0 0.0
    %481 = vmatpush.msra.mxu0 0.0
    %482 = vmatpush.msra.mxu0 0.0
    %483 = vmatpush.msra.mxu0 0.0
    %484 = vmatpush.msra.mxu0 0.0
    %485 = vmatpush.msra.mxu0 0.0
    %486 = vmatpush.msra.mxu0 0.0
    %487 = vmatpush.msra.mxu0 0.0
    %488 = vmatpush.msra.mxu0 %v43
    %489 = vmatpush.msra.mxu0 %v42
    %490 = vmatpush.msra.mxu0 %v41
    %491 = vmatpush.msra.mxu0 %v40
    %492 = vmatmul.f32.gmra.mxu0 %v471
    %v493 = vpop.f32.mrf.mxu0
    %v494 = vadd.f32 %v469, %v493
    %495 = vmatmul.f32.gmra.mxu0 %v474
    %v496 = vpop.f32.mrf.mxu0
    %v497 = vadd.f32 %v469, %v496
    %498 = vdwg.mxu0
    %v499 = vadd.f32 %v103, %v494
    %v500 = vadd.f32 %v106, %v497
    %v501 = vsel %vm109, %v499, 0.0
    %502 = vadd.xlane.f32.xlu0 %v501
    %v503 = vpop.xlane.xlu0 %502
    %v504 = vsel %vm109, %v500, 0.0
    %505 = vadd.xlane.f32.xlu0 %v504
    %v506 = vpop.xlane.xlu0 %505
    %v507 = vrcp.pop 32.0
    %v508 = vmul.f32 32.0, %v507
    %v509 = vsub.f32 1.0, %v508
    %v510 = vmul.f32 %v507, %v509
    %v511 = vadd.f32 %v507, %v510
    %vm512 = vweird.f32 %v507
    %v513 = vsel %vm512, %v507, %v511
    %v514 = vmul.f32 %v503, %v513
    %v515 = vmul.f32 %v506, %v513
    %v516 = vsub.f32 %v499, %v514
    %v517 = vsub.f32 %v500, %v515
    %v518 = vmul.f32 %v516, %v516
    %v519 = vmul.f32 %v517, %v517
    %v520 = vsel %vm109, %v518, 0.0
    %521 = vadd.xlane.f32.xlu0 %v520
    %v522 = vpop.xlane.xlu0 %521
    %v523 = vsel %vm109, %v519, 0.0
    %524 = vadd.xlane.f32.xlu0 %v523
    %v525 = vpop.xlane.xlu0 %524
    %v526 = vmul.f32 %v522, %v513
    %v527 = vmul.f32 %v525, %v513
    %v528 = vadd.f32 %v526, 1e-05
    %v529 = vadd.f32 %v527, 1e-05
    %v530 = vrsqrt.pop %v528
    %v531 = vmul.f32 %v530, %v528
    %v532 = vmul.f32 %v531, %v530
    %v533 = vmul.f32 0.5, %v532
    %v534 = vsub.f32 1.5, %v533
    %v535 = vmul.f32 %v530, %v534
    %vm536 = vweird.f32 %v528
    %vm537 = vweird.f32 %v530
    %vm538 = vmor %vm536, %vm537
    %v539 = vsel %vm538, %v530, %v535
    %v540 = vrsqrt.pop %v529
    %v541 = vmul.f32 %v540, %v529
    %v542 = vmul.f32 %v541, %v540
    %v543 = vmul.f32 0.5, %v542
    %v544 = vsub.f32 1.5, %v543
    %v545 = vmul.f32 %v540, %v544
    %vm546 = vweird.f32 %v529
    %vm547 = vweird.f32 %v540
    %vm548 = vmor %vm546, %vm547
    %v549 = vsel %vm548, %v540, %v545
    %v550 = vmul.f32 %v516, %v539
    %v551 = vmul.f32 %v517, %v549
    %v552 = vperm.slane %v60, 4
    %v553 = vmul.f32 %v550, %v552
    %v554 = vmul.f32 %v551, %v552
    %v555 = vperm.slane %v60, 5
    %v556 = vadd.f32 %v553, %v555
    %v557 = vadd.f32 %v554, %v555
    %v558 = vperm.slane %v60, 2
    %v560 = vsel %vm109, %v556, 0
    %v563 = vsel %vm109, %v557, 0
    %565 = vmatpush.msra.mxu0 0.0
    %566 = vmatpush.msra.mxu0 0.0
    %567 = vmatpush.msra.mxu0 0.0
    %568 = vmatpush.msra.mxu0 0.0
    %569 = vmatpush.msra.mxu0 0.0
    %570 = vmatpush.msra.mxu0 0.0
    %571 = vmatpush.msra.mxu0 0.0
    %572 = vmatpush.msra.mxu0 0.0
    %573 = vmatpush.msra.mxu0 0.0
    %574 = vmatpush.msra.mxu0 0.0
    %575 = vmatpush.msra.mxu0 0.0
    %576 = vmatpush.msra.mxu0 0.0
    %577 = vmatpush.msra.mxu0 %v47
    %578 = vmatpush.msra.mxu0 %v46
    %579 = vmatpush.msra.mxu0 %v45
    %580 = vmatpush.msra.mxu0 %v44
    %581 = vmatmul.f32.gmra.mxu0 %v560
    %v582 = vpop.f32.mrf.mxu0
    %v583 = vadd.f32 %v558, %v582
    %584 = vmatmul.f32.gmra.mxu0 %v563
    %v585 = vpop.f32.mrf.mxu0
    %v586 = vadd.f32 %v558, %v585
    %587 = vdwg.mxu0
    %v588 = vmul.f32 %v583, %v583
    %v589 = vmul.f32 %v586, %v586
    %v590 = vmul.f32 %v583, %v588
    %v591 = vmul.f32 %v586, %v589
    %v592 = vmul.f32 %v590, 0.044715
    %v593 = vmul.f32 %v591, 0.044715
    %v594 = vadd.f32 %v583, %v592
    %v595 = vadd.f32 %v586, %v593
    %v596 = vmul.f32 %v594, 0.7978846
    %v597 = vmul.f32 %v595, 0.7978846
    %v598 = vtanh.pop %v596
    %v599 = vtanh.pop %v597
    %v600 = vadd.f32 %v598, 1.0
    %v601 = vadd.f32 %v599, 1.0
    %v602 = vmul.f32 %v600, 0.5
    %v603 = vmul.f32 %v601, 0.5
    %v604 = vmul.f32 %v583, %v602
    %v605 = vmul.f32 %v586, %v603
    %v606 = vperm.slane %v60, 3
    %v608 = vsel %vm78, %v604, 0
    %v611 = vsel %vm78, %v605, 0
    %613 = vmatpush.msra.mxu0 0.0
    %614 = vmatpush.msra.mxu0 0.0
    %615 = vmatpush.msra.mxu0 0.0
    %616 = vmatpush.msra.mxu0 0.0
    %617 = vmatpush.msra.mxu0 0.0
    %618 = vmatpush.msra.mxu0 0.0
    %619 = vmatpush.msra.mxu0 0.0
    %620 = vmatpush.msra.mxu0 0.0
    %621 = vmatpush.msra.mxu0 %v55
    %622 = vmatpush.msra.mxu0 %v54
    %623 = vmatpush.msra.mxu0 %v53
    %624 = vmatpush.msra.mxu0 %v52
    %625 = vmatpush.msra.mxu0 %v51
    %626 = vmatpush.msra.mxu0 %v50
    %627 = vmatpush.msra.mxu0 %v49
    %628 = vmatpush.msra.mxu0 %v48
    %629 = vmatmul.f32.gmra.mxu0 %v608
    %v630 = vpop.f32.mrf.mxu0
    %v631 = vadd.f32 %v606, %v630
    %632 = vmatmul.f32.gmra.mxu0 %v611
    %v633 = vpop.f32.mrf.mxu0
    %v634 = vadd.f32 %v606, %v633
    %635 = vdwg.mxu0
    %v636 = vadd.f32 %v556, %v631
    %v637 = vadd.f32 %v557, %v634
    %v638 = vsel %vm109, %v636, 0.0
    %639 = vadd.xlane.f32.xlu0 %v638
    %v640 = vpop.xlane.xlu0 %639
    %v641 = vsel %vm109, %v637, 0.0
    %642 = vadd.xlane.f32.xlu0 %v641
    %v643 = vpop.xlane.xlu0 %642
    %v644 = vmul.f32 %v640, %v513
    %v645 = vmul.f32 %v643, %v513
    %v646 = vsub.f32 %v636, %v644
    %v647 = vsub.f32 %v637, %v645
    %v648 = vmul.f32 %v646, %v646
    %v649 = vmul.f32 %v647, %v647
    %v650 = vsel %vm109, %v648, 0.0
    %651 = vadd.xlane.f32.xlu0 %v650
    %v652 = vpop.xlane.xlu0 %651
    %v653 = vsel %vm109, %v649, 0.0
    %654 = vadd.xlane.f32.xlu0 %v653
    %v655 = vpop.xlane.xlu0 %654
    %v656 = vmul.f32 %v652, %v513
    %v657 = vmul.f32 %v655, %v513
    %v658 = vadd.f32 %v656, 1e-05
    %v659 = vadd.f32 %v657, 1e-05
    %v660 = vrsqrt.pop %v658
    %v661 = vmul.f32 %v660, %v658
    %v662 = vmul.f32 %v661, %v660
    %v663 = vmul.f32 0.5, %v662
    %v664 = vsub.f32 1.5, %v663
    %v665 = vmul.f32 %v660, %v664
    %vm666 = vweird.f32 %v658
    %vm667 = vweird.f32 %v660
    %vm668 = vmor %vm666, %vm667
    %v669 = vsel %vm668, %v660, %v665
    %v670 = vrsqrt.pop %v659
    %v671 = vmul.f32 %v670, %v659
    %v672 = vmul.f32 %v671, %v670
    %v673 = vmul.f32 0.5, %v672
    %v674 = vsub.f32 1.5, %v673
    %v675 = vmul.f32 %v670, %v674
    %vm676 = vweird.f32 %v659
    %vm677 = vweird.f32 %v670
    %vm678 = vmor %vm676, %vm677
    %v679 = vsel %vm678, %v670, %v675
    %v680 = vmul.f32 %v646, %v669
    %v681 = vmul.f32 %v647, %v679
    %v682 = vperm.slane %v60, 6
    %v683 = vmul.f32 %v680, %v682
    %v684 = vmul.f32 %v681, %v682
    %v685 = vperm.slane %v60, 7
    %v686 = vadd.f32 %v683, %v685
    %v687 = vadd.f32 %v684, %v685
    %v689 = vrot.slane %v687, 7
    %vm691 = vcmask 1040384
    %v692 = vsel %vm691, %v686, %v689
    %v693 = vperm.slane %v61, 0
    %v695 = vsel %vm109, %v692, 0
    %697 = vmatpush.msra.mxu0 0.0
    %698 = vmatpush.msra.mxu0 0.0
    %699 = vmatpush.msra.mxu0 0.0
    %700 = vmatpush.msra.mxu0 0.0
    %701 = vmatpush.msra.mxu0 0.0
    %702 = vmatpush.msra.mxu0 0.0
    %703 = vmatpush.msra.mxu0 0.0
    %704 = vmatpush.msra.mxu0 0.0
    %705 = vmatpush.msra.mxu0 0.0
    %706 = vmatpush.msra.mxu0 0.0
    %707 = vmatpush.msra.mxu0 0.0
    %708 = vmatpush.msra.mxu0 0.0
    %709 = vmatpush.msra.mxu0 %v59
    %710 = vmatpush.msra.mxu0 %v58
    %711 = vmatpush.msra.mxu0 %v57
    %712 = vmatpush.msra.mxu0 %v56
    %713 = vmatmul.f32.gmra.mxu0 %v695
    %v714 = vpop.f32.mrf.mxu0
    %v715 = vadd.f32 %v693, %v714
    %716 = vdwg.mxu0
    %717 = vst [vmem:[#allocation5] sm:$0x3] %v715
    // Predicated region
    $region14: #{tpu_custom_call.1} parent=1 // pred_check
      _
    $region15: #{tpu_custom_call.1} parent=1 // pred_check_branch
      %719 = sbr.rel (0) target = $region17
    $region16: #{tpu_custom_call.1} parent=1 // pred_region
      %721 = vsyncadd [#allocation4], 0
      %s723 = sshll.u32 [#allocation5], 4
      %s724 = int_to_ptr.vmem [resolvable:$true] %s723
      %s725 = sshll.u32 %s2, 4
      %s726 = int_to_ptr.hbm [resolvable:$true] %s725
      %728 = dma.vmem_to_hbm [thread:$0]  %s724, 32, %s726, [#allocation4]
    $region17: #{tpu_custom_call.1} parent=1 // pred_fallthru
      _
    // Predicated region
    $region18: #{tpu_custom_call.1} parent=1 // pred_check
      _
    $region19: #{tpu_custom_call.1} parent=1 // pred_check_branch
      %730 = sbr.rel (0) target = $region21
    $region20: #{tpu_custom_call.1} parent=1 // pred_region
      %732 = dma.done [#allocation4], 32
    $region21: #{tpu_custom_call.1} parent=1 // pred_fallthru
      _
    %733 = vsyncpa [#allocation3], 1
    %734 = vsyncpa [#allocation4], 1

</llo_original>
